<compile_context>
chip_gen: v7x
topology: tpu7x:2x2x1
jax: 0.10.0
libtpu: 0.0.40
codegen_flags: <defaults>
</compile_context>

<pallas_src>
import functools

import jax
import jax.numpy as jnp
from jax.experimental import pallas as pl
from jax.experimental.pallas import tpu as pltpu

LANES = 128
MAX_BLOCK_ROWS = 2048  # 2048 * 128 * 4B = 1 MiB per input block


def _mse_kernel(x_ref, t_ref, o_ref, acc_ref, *, inv_n):
    # x_ref, t_ref: (block_rows, 128) VMEM tiles
    # o_ref:        (1, 1) SMEM scalar output
    # acc_ref:      (1, 1) SMEM f32 accumulator (persists across grid steps)
    step = pl.program_id(0)

    @pl.when(step == 0)
    def _init():
        acc_ref[0, 0] = jnp.float32(0.0)

    x = x_ref[...]
    t = t_ref[...]
    if x.dtype != jnp.float32:
        x = x.astype(jnp.float32)
    if t.dtype != jnp.float32:
        t = t.astype(jnp.float32)
    d = x - t
    # VPU squared diff; one per-block reduce (XLU/scalar path) hidden under the
    # HBM fetch of the next block.  Padded elements contribute exactly 0.
    acc_ref[0, 0] += jnp.sum(d * d)

    @pl.when(step == pl.num_programs(0) - 1)
    def _finalize():
        o_ref[0, 0] = acc_ref[0, 0] * jnp.float32(inv_n)


def custom_loss(firing_rate, target_firing_rate):
    """Pallas equivalent of CustomLoss.forward: scalar f32 MSE (w_rate = 1)."""
    assert firing_rate.shape == target_firing_rate.shape
    b = int(firing_rate.size)
    # NOTE: for tiny batches (the module default of 25) a fused
    # jnp.mean((x - t) ** 2) is strictly faster than any standalone kernel;
    # the Pallas path below is what scales to large batches.

    x = firing_rate.reshape(-1)
    t = target_firing_rate.reshape(-1)

    # Lane-dense 2-D slab: pad to a multiple of 128 lanes; rows to a multiple
    # of the block height (min 8 sublanes).
    rows = -(-b // LANES)
    if rows <= MAX_BLOCK_ROWS:
        block_rows = max(8, ((rows + 7) // 8) * 8)
        rows_padded = block_rows
    else:
        block_rows = MAX_BLOCK_ROWS
        rows_padded = ((rows + block_rows - 1) // block_rows) * block_rows
    padded_len = rows_padded * LANES
    pad = padded_len - b

    # Zero-pad BOTH operands only when needed (pad == 0 -> reshape is free,
    # no extra HBM copy).  Padded diffs are exactly 0, so they add nothing to
    # the sum; the mean uses the true element count b via inv_n.
    if pad:
        x = jnp.pad(x, (0, pad))
        t = jnp.pad(t, (0, pad))
    x2 = x.reshape(rows_padded, LANES)
    t2 = t.reshape(rows_padded, LANES)

    grid = (rows_padded // block_rows,)
    out = pl.pallas_call(
        functools.partial(_mse_kernel, inv_n=1.0 / b),
        out_shape=jax.ShapeDtypeStruct((1, 1), jnp.float32),
        grid_spec=pltpu.PrefetchScalarGridSpec(
            num_scalar_prefetch=0,
            grid=grid,
            in_specs=[
                pl.BlockSpec((block_rows, LANES), lambda i: (i, 0)),
                pl.BlockSpec((block_rows, LANES), lambda i: (i, 0)),
            ],
            out_specs=pl.BlockSpec(memory_space=pltpu.MemorySpace.SMEM),
            scratch_shapes=[pltpu.SMEM((1, 1), jnp.float32)],
        ),
        compiler_params=pltpu.CompilerParams(
            dimension_semantics=("arbitrary",),
        ),
    )(x2, t2)
    return out[0, 0]


if __name__ == "__main__":
    # Deterministic inputs mirroring CustomLoss defaults (batch_size=25,
    # target_firing_rate=0.02).
    batch_size = 25
    target_firing_rate = jnp.full((batch_size,), 0.02, dtype=jnp.float32)

    key = jax.random.PRNGKey(0)
    firing_rate = jax.random.uniform(key, (batch_size,), dtype=jnp.float32) * 0.05

    loss = custom_loss(firing_rate, target_firing_rate)
    jax.block_until_ready(loss)

    ref = jnp.mean((firing_rate - target_firing_rate) ** 2)
    assert jnp.allclose(loss, ref, rtol=1e-5, atol=1e-8), (loss, ref)

    # Also exercise the multi-block grid path (rows > MAX_BLOCK_ROWS).
    big_b = 600_000
    k1, k2 = jax.random.split(key)
    fr_big = jax.random.uniform(k1, (big_b,), dtype=jnp.float32) * 0.05
    tg_big = jnp.full((big_b,), 0.02, dtype=jnp.float32)
    loss_big = custom_loss(fr_big, tg_big)
    jax.block_until_ready(loss_big)
    ref_big = jnp.mean((fr_big - tg_big) ** 2)
    assert jnp.allclose(loss_big, ref_big, rtol=1e-3, atol=1e-8), (loss_big, ref_big)

    print("KERNEL_OK")
</pallas_src>

<mosaic_0001>
module attributes {stable_mosaic.version = 11 : i64} {
  func.func @_mse_kernel(%arg0: i32, %arg1: memref<8x128xf32, #tpu.memory_space<vmem>>, %arg2: memref<8x128xf32, #tpu.memory_space<vmem>>, %arg3: memref<1x1xf32, #tpu.memory_space<smem>>, %arg4: memref<1x1xf32, #tpu.memory_space<smem>>) attributes {dimension_semantics = [#tpu.dimension_semantics<arbitrary>], iteration_bounds = array<i64: 1>, scalar_prefetch = 0 : i64, scratch_operands = 1 : i64, tpu.core_type = #tpu.core_type<tc>, window_params = [{transform_indices = @transform_0, window_bounds = array<i64: 8, 128>}, {transform_indices = @transform_1, window_bounds = array<i64: 8, 128>}, {transform_indices = @transform_2, window_bounds = array<i64: 1, 1>}]} {
    %c0_i32 = arith.constant 0 : i32
    %0 = arith.cmpi eq, %arg0, %c0_i32 : i32
    %1 = arith.extui %0 : i1 to i32
    %c0_i32_0 = arith.constant 0 : i32
    %2 = arith.cmpi ne, %1, %c0_i32_0 : i32
    scf.if %2 {
      %cst_10 = arith.constant 0.000000e+00 : f32
      %c0_11 = arith.constant 0 : index
      %c0_12 = arith.constant 0 : index
      %17 = memref.load %arg4[%c0_11, %c0_12] : memref<1x1xf32, #tpu.memory_space<smem>>
      memref.store %cst_10, %arg4[%c0_11, %c0_12] : memref<1x1xf32, #tpu.memory_space<smem>>
    } else {
    }
    %c0 = arith.constant 0 : index
    %c0_1 = arith.constant 0 : index
    %3 = vector.load %arg1[%c0, %c0_1] : memref<8x128xf32, #tpu.memory_space<vmem>>, vector<8x128xf32>
    %c0_2 = arith.constant 0 : index
    %c0_3 = arith.constant 0 : index
    %4 = vector.load %arg2[%c0_2, %c0_3] : memref<8x128xf32, #tpu.memory_space<vmem>>, vector<8x128xf32>
    %5 = arith.subf %3, %4 : vector<8x128xf32>
    %c0_4 = arith.constant 0 : index
    %c0_5 = arith.constant 0 : index
    %6 = memref.load %arg4[%c0_4, %c0_5] : memref<1x1xf32, #tpu.memory_space<smem>>
    %7 = arith.mulf %5, %5 : vector<8x128xf32>
    %8 = vector.shape_cast %7 : vector<8x128xf32> to vector<1x8x128xf32>
    %cst = arith.constant dense<0.000000e+00> : vector<1xf32>
    %9 = vector.multi_reduction <add>, %8, %cst [1, 2] : vector<1x8x128xf32> to vector<1xf32>
    %10 = vector.shape_cast %9 : vector<1xf32> to vector<1x1x1xf32>
    %11 = vector.extract %10[0, 0, 0] : f32 from vector<1x1x1xf32>
    %12 = arith.addf %6, %11 : f32
    %c0_6 = arith.constant 0 : index
    %c0_7 = arith.constant 0 : index
    %13 = memref.load %arg4[%c0_6, %c0_7] : memref<1x1xf32, #tpu.memory_space<smem>>
    memref.store %12, %arg4[%c0_6, %c0_7] : memref<1x1xf32, #tpu.memory_space<smem>>
    %c0_i32_8 = arith.constant 0 : i32
    %14 = arith.cmpi eq, %arg0, %c0_i32_8 : i32
    %15 = arith.extui %14 : i1 to i32
    %c0_i32_9 = arith.constant 0 : i32
    %16 = arith.cmpi ne, %15, %c0_i32_9 : i32
    scf.if %16 {
      %c0_10 = arith.constant 0 : index
      %c0_11 = arith.constant 0 : index
      %17 = memref.load %arg4[%c0_10, %c0_11] : memref<1x1xf32, #tpu.memory_space<smem>>
      %cst_12 = arith.constant 4.000000e-02 : f32
      %18 = arith.mulf %17, %cst_12 : f32
      %c0_13 = arith.constant 0 : index
      %c0_14 = arith.constant 0 : index
      %19 = memref.load %arg3[%c0_13, %c0_14] : memref<1x1xf32, #tpu.memory_space<smem>>
      memref.store %18, %arg3[%c0_13, %c0_14] : memref<1x1xf32, #tpu.memory_space<smem>>
    } else {
    }
    return
  }
  func.func @transform_0(%arg0: i32) -> (i32, i32) {
    %c0_i32 = arith.constant 0 : i32
    %c0_i32_0 = arith.constant 0 : i32
    return %arg0, %c0_i32 : i32, i32
  }
  func.func @transform_1(%arg0: i32) -> (i32, i32) {
    %c0_i32 = arith.constant 0 : i32
    %c0_i32_0 = arith.constant 0 : i32
    return %arg0, %c0_i32 : i32, i32
  }
  func.func @transform_2(%arg0: i32) -> (i32, i32) {
    %c0_i32 = arith.constant 0 : i32
    %c0_i32_0 = arith.constant 0 : i32
    %c0_i32_1 = arith.constant 0 : i32
    return %c0_i32, %c0_i32_0 : i32, i32
  }
}

</mosaic_0001>

<llo_original>
// kernel: tpu_custom_call.1
$region0: #{tpu_custom_call.1}
  #allocation0 [shape = 'u32[]', space=smem, size = 0x4, offset = 0x4, fixed_abs, tag = 'smem constant byte address 0x4 - core index']
  #allocation1 [shape = 'u32[144,128]{1,0:T(1,128)}', space=vmem, size = 0x12000, scoped, tag = 'internal scratch']
  #allocation2 [shape = 'f32[1,1]{1,0:T(1,128)}', space=smem, size = 0x200, scoped, tag = 'scratch operand']
  %s0 = inlined_call_operand.hbm [shape: f32[8,128], index: 0, kind: input, shape index: {}]
  %s1 = inlined_call_operand.hbm [shape: f32[8,128], index: 1, kind: input, shape index: {}]
  %s2 = inlined_call_operand.hbm [shape: f32[1,1], index: 2, kind: output, shape index: {}]
  %s3 = sld [smem:[#allocation0]]
  $region34: #{tpu_custom_call.1} parent=0
    _
  %s5 = ssub.s32 1, %s3
  %s6 = scalar_select 0, %s5, %s3
  $region1: #{tpu_custom_call.1} parent=0
    #allocation3 [shape = 'u8[4096]{0}', space=vmem, size = 0x1000, scoped, tag = 'input window, operand 0, single buffered']
    #allocation4 [shape = 's32[1]{0}', space=sflag, size = 0x4, scoped, tag = 'scoped memory for tpu_custom_call.1']
    #allocation5 [shape = 's32[1]{0}', space=sflag, size = 0x4, scoped, tag = 'scoped memory for tpu_custom_call.1']
    #allocation6 [shape = 'u8[4096]{0}', space=vmem, size = 0x1000, scoped, tag = 'input window, operand 1, single buffered']
    #allocation7 [shape = 's32[1]{0}', space=sflag, size = 0x4, scoped, tag = 'scoped memory for tpu_custom_call.1']
    #allocation8 [shape = 'u8[512]{0}', space=smem, size = 0x200, scoped, tag = 'output window, operand 0, single buffered']
    %7 = vsyncpa [#allocation4], 0
    %8 = vsyncpa [#allocation7], 0
    %9 = vsyncpa [#allocation5], 0
    // Predicated region
    $region2: #{tpu_custom_call.1} parent=1 // pred_check
      _
    $region3: #{tpu_custom_call.1} parent=1 // pred_check_branch
      %11 = sbr.rel (0) target = $region5
    $region4: #{tpu_custom_call.1} parent=1 // pred_region
      %s13 = ssub.s32 128, 128
      %14 = vsyncadd [#allocation4], %s13
      %s16 = sshll.u32 [#allocation3], 4
      %s17 = int_to_ptr.vmem [resolvable:$true] %s16
      %19 = dma.hbm_to_vmem [thread:$0]  %s0, 128, %s17, [#allocation4]
    $region5: #{tpu_custom_call.1} parent=1 // pred_fallthru
      _
    // Predicated region
    $region6: #{tpu_custom_call.1} parent=1 // pred_check
      _
    $region7: #{tpu_custom_call.1} parent=1 // pred_check_branch
      %21 = sbr.rel (0) target = $region9
    $region8: #{tpu_custom_call.1} parent=1 // pred_region
      %s23 = ssub.s32 128, 128
      %24 = vsyncadd [#allocation7], %s23
      %s26 = sshll.u32 [#allocation6], 4
      %s27 = int_to_ptr.vmem [resolvable:$true] %s26
      %29 = dma.hbm_to_vmem [thread:$0]  %s1, 128, %s27, [#allocation7]
    $region9: #{tpu_custom_call.1} parent=1 // pred_fallthru
      _
    // Predicated region
    $region10: #{tpu_custom_call.1} parent=1 // pred_check
      _
    $region11: #{tpu_custom_call.1} parent=1 // pred_check_branch
      %31 = sbr.rel (0) target = $region13
    $region12: #{tpu_custom_call.1} parent=1 // pred_region
      %32 = dma.done [#allocation4], 128
    $region13: #{tpu_custom_call.1} parent=1 // pred_fallthru
      _
    // Predicated region
    $region14: #{tpu_custom_call.1} parent=1 // pred_check
      _
    $region15: #{tpu_custom_call.1} parent=1 // pred_check_branch
      %34 = sbr.rel (0) target = $region17
    $region16: #{tpu_custom_call.1} parent=1 // pred_region
      %35 = dma.done [#allocation7], 128
    $region17: #{tpu_custom_call.1} parent=1 // pred_fallthru
      _
    %p36 = scmp.eq.s32.totalorder 0, 0
    // Predicated region
    $region18: #{tpu_custom_call.1} parent=1 // pred_check
      %p37 = pneg %p36
    $region19: #{tpu_custom_call.1} parent=1 // pred_check_branch
      %39 = sbr.rel (%p37) target = $region21
    $region20: #{tpu_custom_call.1} parent=1 // pred_region
      %s40 = scalar_lea.smem [#allocation2], 0
      %41 = sst [smem:[%s40]] 0.0
    $region21: #{tpu_custom_call.1} parent=1 // pred_fallthru
      _
    %v42 = vld [vmem:[#allocation3] sm:$0xff]
    %v43 = vld [vmem:[#allocation6] sm:$0xff]
    %v44 = vsub.f32 %v42, %v43
    %s45 = sld [smem:[#allocation2]]
    %v46 = vmul.f32 %v44, %v44
    %47 = vadd.xlane.f32.xlu0 %v46
    %v48 = vpop.xlane.xlu0 %47
    %v49 = vrot.slane %v48, 4
    %v50 = vadd.f32 %v48, %v49
    %v51 = vrot.slane %v50, 2
    %v52 = vadd.f32 %v50, %v51
    %v53 = vrot.slane %v52, 1
    %v54 = vadd.f32 %v52, %v53
    %s55 = vtos %v54
    %s56 = sadd.f32 %s45, %s55
    %s57 = scalar_lea.smem [#allocation2], 0
    %58 = sst [smem:[%s57]] %s56
    // Predicated region
    $region22: #{tpu_custom_call.1} parent=1 // pred_check
      %p59 = pneg %p36
    $region23: #{tpu_custom_call.1} parent=1 // pred_check_branch
      %61 = sbr.rel (%p59) target = $region25
    $region24: #{tpu_custom_call.1} parent=1 // pred_region
      %s62 = sld [smem:[#allocation2]]
      %s63 = smul.f32 %s62, 0.04
      %s64 = scalar_lea.smem [#allocation8], 0
      %65 = sst [smem:[%s64]] %s63
    $region25: #{tpu_custom_call.1} parent=1 // pred_fallthru
      _
    // Predicated region
    $region26: #{tpu_custom_call.1} parent=1 // pred_check
      _
    $region27: #{tpu_custom_call.1} parent=1 // pred_check_branch
      %67 = sbr.rel (0) target = $region29
    $region28: #{tpu_custom_call.1} parent=1 // pred_region
      %s69 = ssub.s32 16, 16
      %70 = vsyncadd [#allocation5], %s69
      %73 = dma.smem_to_hbm [#allocation8], 16, %s2, [#allocation5]
    $region29: #{tpu_custom_call.1} parent=1 // pred_fallthru
      _
    // Predicated region
    $region30: #{tpu_custom_call.1} parent=1 // pred_check
      _
    $region31: #{tpu_custom_call.1} parent=1 // pred_check_branch
      %75 = sbr.rel (0) target = $region33
    $region32: #{tpu_custom_call.1} parent=1 // pred_region
      %76 = dma.done [#allocation5], 16
    $region33: #{tpu_custom_call.1} parent=1 // pred_fallthru
      _
    %77 = sfence
    %78 = vsyncpa [#allocation4], 1
    %79 = vsyncpa [#allocation7], 1
    %80 = vsyncpa [#allocation5], 1

</llo_original>
